<compile_context>
chip_gen: v6e
topology: v6e:2x2x1
jax: 0.10.0
libtpu: 0.0.40
codegen_flags: <defaults>
</compile_context>

<pallas_src>
import jax
import jax.numpy as jnp
from jax.experimental import pallas as pl
from jax.experimental.pallas import tpu as pltpu


def _round_up(x, m):
    return ((x + m - 1) // m) * m


def _cdiv(a, b):
    return (a + b - 1) // b


def _geglu_kernel(x_ref, w_ref, b_ref, o_ref):
    # x_ref: (TM, K)   w_ref: (2, K, TN)   b_ref: (2, 1, TN) f32   o_ref: (TM, TN)
    x = x_ref[...]
    if x.dtype != w_ref.dtype:                  # trace-time branch (e.g. f32 x, bf16 W)
        x = x.astype(w_ref.dtype)
    # Two MXU matmuls (same total MXU work as one fused dot), f32 accumulation.
    a = jnp.dot(x, w_ref[0], preferred_element_type=jnp.float32) + b_ref[0]
    g = jnp.dot(x, w_ref[1], preferred_element_type=jnp.float32) + b_ref[1]
    # sigmoid -> EUP slot, multiply -> VPU slot; tail kept in f32 (v5e has no bf16 VPU/EUP).
    o_ref[...] = (a * jax.nn.sigmoid(g)).astype(o_ref.dtype)
    # TODO(synk): dropout with p > 0 (training mode) would need pltpu.prng_* masking;
    # the module default p = 0.0 is the identity implemented here.


def pack_geglu_params(w, b, param_dtype=None):
    """One-time (init-time) packing of nn.Linear(dim, 2*dim) params (PyTorch layout).

    w: (2*dim, dim), b: (2*dim,).  Returns:
      w_packed: (2, dim, dim)   -- [W_a^T, W_g^T] stacked as [half, K, N]
      b_packed: (2, 1, dim) f32
    No padding: full-array dims are exempt from the (8,128) BlockSpec rule, so the
    forward wrapper never pads/slices x or the output (no extra HBM passes).
    """
    two_dim, dim = w.shape
    assert two_dim == 2 * dim and b.shape == (2 * dim,)
    dtype = w.dtype if param_dtype is None else param_dtype
    w_a = jnp.transpose(w[:dim, :]).astype(dtype)     # (K=dim, N=dim)
    w_g = jnp.transpose(w[dim:, :]).astype(dtype)
    w_packed = jnp.stack([w_a, w_g], axis=0)          # (2, dim, dim)
    b_packed = jnp.stack([b[:dim], b[dim:]], axis=0).astype(jnp.float32).reshape(2, 1, dim)
    return w_packed, b_packed


def geglu_pallas(x, w_packed, b_packed, *, block_m=512):
    """GeGLU forward. x: (..., dim); w_packed/b_packed from pack_geglu_params."""
    *lead, dim = x.shape
    assert w_packed.shape == (2, dim, dim)
    assert b_packed.shape == (2, 1, dim)

    x2d = x.reshape(-1, dim)
    M = x2d.shape[0]
    x_it = jnp.dtype(x2d.dtype).itemsize
    w_it = jnp.dtype(w_packed.dtype).itemsize
    o_it = x_it

    # --- Chip-aware VMEM budget (v7x: 64 MiB/TC, v5e/v6e: 128 MiB). ---
    try:
        vmem_cap = int(pltpu.get_tpu_info().vmem_capacity_bytes)
    except Exception:
        vmem_cap = 64 * 1024 * 1024            # conservative: fits every generation
    usable = vmem_cap - 8 * 1024 * 1024        # headroom for compiler internal scratch

    # --- N (output-column) tiling: shrink TN until the weight block fits. ---
    def _w_bytes(tn_):
        nbuf = 1 if tn_ >= dim else 2          # resident W is single-buffered
        return nbuf * (2 * dim * tn_ * w_it + 2 * tn_ * 4)

    tn = dim
    if dim % 128 == 0:
        while tn > 128 and _w_bytes(tn) > 0.55 * usable:
            new_tn = max(128, _round_up(tn // 2, 128))
            if new_tn == tn:
                break
            tn = new_tn
    # TODO(synk): a dim that is both huge and not a multiple of 128 cannot be N-tiled
    # here (relies on the full-dim exemption); that corner would need K-tiling.
    nt = _cdiv(dim, tn)

    # --- M (row) tiling: scale TM so x/out tiles + f32 intermediates fit. ---
    per_row = (2 * dim * x_it          # x tile, double-buffered
               + 2 * tn * o_it         # out tile, double-buffered
               + 4 * tn * 4)           # f32 a, g and sigmoid/product temporaries
    rem = max(usable - _w_bytes(tn) - 2 * 1024 * 1024, per_row * 8)
    if M < 128:
        tm = M                          # full-array dim: always a legal block
    else:
        tm = min(block_m, rem // per_row, (M // 128) * 128)
        if M > 256:                     # >= 2 M-tiles so both v7x TensorCores get work
            tm = min(tm, _round_up(_cdiv(M, 2), 256))
        tm = max(128, (tm // 128) * 128)   # MXU/bf16-friendly 128-aligned rows
    mt = _cdiv(M, tm)                   # partial last block is masked by Pallas

    vmem_limit = int(usable)            # tile choice already respects the budget

    def _make_call(single_buffer_resident):
        res_kwargs = {}
        if single_buffer_resident and nt == 1:
            # Constant index_map => no re-DMA; single buffer halves the W footprint.
            res_kwargs = dict(pipeline_mode=pl.Buffered(1))
        grid_spec = pltpu.PrefetchScalarGridSpec(
            num_scalar_prefetch=0,
            grid=(nt, mt),              # N outer (each W block fetched once),
            in_specs=[                  # M inner (x/out stream through HBM).
                pl.BlockSpec((tm, dim), lambda j, i: (i, 0)),
                pl.BlockSpec((2, dim, tn), lambda j, i: (0, 0, j), **res_kwargs),
                pl.BlockSpec((2, 1, tn), lambda j, i: (0, 0, j), **res_kwargs),
            ],
            out_specs=pl.BlockSpec((tm, tn), lambda j, i: (i, j)),
        )
        return pl.pallas_call(
            _geglu_kernel,
            out_shape=jax.ShapeDtypeStruct((M, dim), x.dtype),
            grid_spec=grid_spec,
            compiler_params=pltpu.CompilerParams(
                dimension_semantics=("parallel", "parallel"),
                vmem_limit_bytes=vmem_limit,
            ),
        )

    try:
        out2d = _make_call(True)(x2d, w_packed, b_packed)
    except Exception:
        # Older runtimes may reject Buffered(1); fall back to default buffering.
        out2d = _make_call(False)(x2d, w_packed, b_packed)

    return out2d.reshape(*lead, dim)


def geglu_ref(x, w, b):
    """Pure-JAX reference mirroring the PyTorch module (dropout p=0)."""
    y = x @ w.T + b
    a, gate = jnp.split(y, 2, axis=-1)
    return a * jax.nn.sigmoid(gate)


if __name__ == "__main__":
    key = jax.random.PRNGKey(0)
    k_x, k_w, k_b, k_x2, k_x3 = jax.random.split(key, 5)

    def make_params(kw, kb, dim):
        bound = 1.0 / (dim ** 0.5)
        w = jax.random.uniform(kw, (2 * dim, dim), minval=-bound, maxval=bound,
                               dtype=jnp.float32)
        b = jax.random.uniform(kb, (2 * dim,), minval=-bound, maxval=bound,
                               dtype=jnp.float32)
        return w, b

    # 1) Module-implied small shape: batch=2, seq=8, dim=32 (f32).
    dim = 32
    x = jax.random.normal(k_x, (2, 8, dim), dtype=jnp.float32)
    w, b = make_params(k_w, k_b, dim)
    wp, bp = pack_geglu_params(w, b)
    out = geglu_pallas(x, wp, bp)
    jax.block_until_ready(out)
    assert out.shape == x.shape
    assert jnp.allclose(out, geglu_ref(x, w, b), atol=1e-2, rtol=1e-2)

    # 2) 128-aligned shape exercising an M-tiled grid (>=2 tiles), f32.
    dim2 = 256
    x2 = jax.random.normal(k_x2, (2, 512, dim2), dtype=jnp.float32)
    kw2, kb2 = jax.random.split(k_w)
    w2, b2 = make_params(kw2, kb2, dim2)
    w2p, b2p = pack_geglu_params(w2, b2)
    out2 = geglu_pallas(x2, w2p, b2p)
    jax.block_until_ready(out2)
    ref2 = geglu_ref(x2, w2, b2)
    assert jnp.allclose(out2, ref2, atol=2e-2, rtol=2e-2)

    # 3) bf16 activations + bf16 weights (f32 accumulation in-kernel).
    w2_bf, b2_bf = pack_geglu_params(w2, b2, param_dtype=jnp.bfloat16)
    out2_bf = geglu_pallas(x2.astype(jnp.bfloat16), w2_bf, b2_bf)
    jax.block_until_ready(out2_bf)
    assert jnp.allclose(out2_bf.astype(jnp.float32), ref2, atol=1e-1, rtol=1e-1)

    # 4) M not a multiple of the tile (masked partial last block) and dim % 128 != 0.
    dim3 = 96
    x3 = jax.random.normal(k_x3, (3, 100, dim3), dtype=jnp.float32)
    kw3, kb3 = jax.random.split(k_b)
    w3, b3 = make_params(kw3, kb3, dim3)
    w3p, b3p = pack_geglu_params(w3, b3)
    out3 = geglu_pallas(x3, w3p, b3p)
    jax.block_until_ready(out3)
    assert jnp.allclose(out3, geglu_ref(x3, w3, b3), atol=2e-2, rtol=2e-2)

    print("KERNEL_OK")
</pallas_src>

<mosaic_0001>
module attributes {stable_mosaic.version = 11 : i64} {
  func.func @_geglu_kernel(%arg0: i32, %arg1: i32, %arg2: memref<16x32xf32, #tpu.memory_space<vmem>>, %arg3: memref<2x32x32xf32, #tpu.memory_space<vmem>>, %arg4: memref<2x1x32xf32, #tpu.memory_space<vmem>>, %arg5: memref<16x32xf32, #tpu.memory_space<vmem>>) attributes {dimension_semantics = [#tpu.dimension_semantics<parallel>, #tpu.dimension_semantics<parallel>], iteration_bounds = array<i64: 1, 1>, scalar_prefetch = 0 : i64, scratch_operands = 0 : i64, tpu.core_type = #tpu.core_type<tc>, window_params = [{transform_indices = @transform_0, window_bounds = array<i64: 16, 32>}, {pipeline_mode = #tpu.pipeline_mode<synchronous>, transform_indices = @transform_1, window_bounds = array<i64: 2, 32, 32>}, {pipeline_mode = #tpu.pipeline_mode<synchronous>, transform_indices = @transform_2, window_bounds = array<i64: 2, 1, 32>}, {transform_indices = @transform_3, window_bounds = array<i64: 16, 32>}]} {
    %c0 = arith.constant 0 : index
    %c0_0 = arith.constant 0 : index
    %0 = vector.load %arg2[%c0, %c0_0] : memref<16x32xf32, #tpu.memory_space<vmem>>, vector<16x32xf32>
    %c0_1 = arith.constant 0 : index
    %c0_2 = arith.constant 0 : index
    %c0_3 = arith.constant 0 : index
    %1 = vector.load %arg3[%c0_1, %c0_2, %c0_3] : memref<2x32x32xf32, #tpu.memory_space<vmem>>, vector<1x32x32xf32>
    %2 = vector.shape_cast %1 : vector<1x32x32xf32> to vector<32x32xf32>
    %cst = arith.constant dense<0.000000e+00> : vector<16x32xf32>
    %3 = tpu.matmul %0, %2, %cst {dimension_numbers = #tpu.dot_dimension_numbers<[1], [0], [0], [1], [0, 0, 1, 1], [], []>} : vector<16x32xf32>, vector<32x32xf32>, vector<16x32xf32> -> vector<16x32xf32>
    %c0_4 = arith.constant 0 : index
    %c0_5 = arith.constant 0 : index
    %c0_6 = arith.constant 0 : index
    %4 = vector.load %arg4[%c0_4, %c0_5, %c0_6] : memref<2x1x32xf32, #tpu.memory_space<vmem>>, vector<1x1x32xf32>
    %5 = vector.shape_cast %4 : vector<1x1x32xf32> to vector<1x32xf32>
    %6 = vector.broadcast %5 : vector<1x32xf32> to vector<16x32xf32>
    %7 = arith.addf %3, %6 : vector<16x32xf32>
    %c1 = arith.constant 1 : index
    %c0_7 = arith.constant 0 : index
    %c0_8 = arith.constant 0 : index
    %8 = vector.load %arg3[%c1, %c0_7, %c0_8] : memref<2x32x32xf32, #tpu.memory_space<vmem>>, vector<1x32x32xf32>
    %9 = vector.shape_cast %8 : vector<1x32x32xf32> to vector<32x32xf32>
    %cst_9 = arith.constant dense<0.000000e+00> : vector<16x32xf32>
    %10 = tpu.matmul %0, %9, %cst_9 {dimension_numbers = #tpu.dot_dimension_numbers<[1], [0], [0], [1], [0, 0, 1, 1], [], []>} : vector<16x32xf32>, vector<32x32xf32>, vector<16x32xf32> -> vector<16x32xf32>
    %c1_10 = arith.constant 1 : index
    %c0_11 = arith.constant 0 : index
    %c0_12 = arith.constant 0 : index
    %11 = vector.load %arg4[%c1_10, %c0_11, %c0_12] : memref<2x1x32xf32, #tpu.memory_space<vmem>>, vector<1x1x32xf32>
    %12 = vector.shape_cast %11 : vector<1x1x32xf32> to vector<1x32xf32>
    %13 = vector.broadcast %12 : vector<1x32xf32> to vector<16x32xf32>
    %14 = arith.addf %10, %13 : vector<16x32xf32>
    %15 = arith.negf %14 : vector<16x32xf32>
    %16 = math.exp %15 : vector<16x32xf32>
    %cst_13 = arith.constant 1.000000e+00 : f32
    %17 = vector.broadcast %cst_13 : f32 to vector<16x32xf32>
    %18 = arith.addf %17, %16 : vector<16x32xf32>
    %19 = arith.divf %17, %18 : vector<16x32xf32>
    %20 = arith.mulf %7, %19 : vector<16x32xf32>
    %c0_14 = arith.constant 0 : index
    %c0_15 = arith.constant 0 : index
    %21 = vector.load %arg5[%c0_14, %c0_15] : memref<16x32xf32, #tpu.memory_space<vmem>>, vector<16x32xf32>
    tpu.vector_store %arg5[%c0_14, %c0_15], %20 {strides = array<i32>} : memref<16x32xf32, #tpu.memory_space<vmem>>, vector<16x32xf32>,
    return
  }
  func.func @transform_0(%arg0: i32, %arg1: i32) -> (i32, i32) {
    %c0_i32 = arith.constant 0 : i32
    %c0_i32_0 = arith.constant 0 : i32
    return %arg1, %c0_i32 : i32, i32
  }
  func.func @transform_1(%arg0: i32, %arg1: i32) -> (i32, i32, i32) {
    %c0_i32 = arith.constant 0 : i32
    %c0_i32_0 = arith.constant 0 : i32
    %c0_i32_1 = arith.constant 0 : i32
    return %c0_i32, %c0_i32_0, %arg0 : i32, i32, i32
  }
  func.func @transform_2(%arg0: i32, %arg1: i32) -> (i32, i32, i32) {
    %c0_i32 = arith.constant 0 : i32
    %c0_i32_0 = arith.constant 0 : i32
    %c0_i32_1 = arith.constant 0 : i32
    return %c0_i32, %c0_i32_0, %arg0 : i32, i32, i32
  }
  func.func @transform_3(%arg0: i32, %arg1: i32) -> (i32, i32) {
    %c0_i32 = arith.constant 0 : i32
    return %arg1, %arg0 : i32, i32
  }
}

module attributes {stable_mosaic.version = 11 : i64} {
  func.func @_geglu_kernel(%arg0: i32, %arg1: i32, %arg2: memref<16x32xf32, #tpu.memory_space<vmem>>, %arg3: memref<2x32x32xf32, #tpu.memory_space<vmem>>, %arg4: memref<2x1x32xf32, #tpu.memory_space<vmem>>, %arg5: memref<16x32xf32, #tpu.memory_space<vmem>>) attributes {dimension_semantics = [#tpu.dimension_semantics<parallel>, #tpu.dimension_semantics<parallel>], iteration_bounds = array<i64: 1, 1>, scalar_prefetch = 0 : i64, scratch_operands = 0 : i64, tpu.core_type = #tpu.core_type<tc>, window_params = [{transform_indices = @transform_0, window_bounds = array<i64: 16, 32>}, {transform_indices = @transform_1, window_bounds = array<i64: 2, 32, 32>}, {transform_indices = @transform_2, window_bounds = array<i64: 2, 1, 32>}, {transform_indices = @transform_3, window_bounds = array<i64: 16, 32>}]} {
    %c0 = arith.constant 0 : index
    %c0_0 = arith.constant 0 : index
    %0 = vector.load %arg2[%c0, %c0_0] : memref<16x32xf32, #tpu.memory_space<vmem>>, vector<16x32xf32>
    %c0_1 = arith.constant 0 : index
    %c0_2 = arith.constant 0 : index
    %c0_3 = arith.constant 0 : index
    %1 = vector.load %arg3[%c0_1, %c0_2, %c0_3] : memref<2x32x32xf32, #tpu.memory_space<vmem>>, vector<1x32x32xf32>
    %2 = vector.shape_cast %1 : vector<1x32x32xf32> to vector<32x32xf32>
    %cst = arith.constant dense<0.000000e+00> : vector<16x32xf32>
    %3 = tpu.matmul %0, %2, %cst {dimension_numbers = #tpu.dot_dimension_numbers<[1], [0], [0], [1], [0, 0, 1, 1], [], []>} : vector<16x32xf32>, vector<32x32xf32>, vector<16x32xf32> -> vector<16x32xf32>
    %c0_4 = arith.constant 0 : index
    %c0_5 = arith.constant 0 : index
    %c0_6 = arith.constant 0 : index
    %4 = vector.load %arg4[%c0_4, %c0_5, %c0_6] : memref<2x1x32xf32, #tpu.memory_space<vmem>>, vector<1x1x32xf32>
    %5 = vector.shape_cast %4 : vector<1x1x32xf32> to vector<1x32xf32>
    %6 = vector.broadcast %5 : vector<1x32xf32> to vector<16x32xf32>
    %7 = arith.addf %3, %6 : vector<16x32xf32>
    %c1 = arith.constant 1 : index
    %c0_7 = arith.constant 0 : index
    %c0_8 = arith.constant 0 : index
    %8 = vector.load %arg3[%c1, %c0_7, %c0_8] : memref<2x32x32xf32, #tpu.memory_space<vmem>>, vector<1x32x32xf32>
    %9 = vector.shape_cast %8 : vector<1x32x32xf32> to vector<32x32xf32>
    %cst_9 = arith.constant dense<0.000000e+00> : vector<16x32xf32>
    %10 = tpu.matmul %0, %9, %cst_9 {dimension_numbers = #tpu.dot_dimension_numbers<[1], [0], [0], [1], [0, 0, 1, 1], [], []>} : vector<16x32xf32>, vector<32x32xf32>, vector<16x32xf32> -> vector<16x32xf32>
    %c1_10 = arith.constant 1 : index
    %c0_11 = arith.constant 0 : index
    %c0_12 = arith.constant 0 : index
    %11 = vector.load %arg4[%c1_10, %c0_11, %c0_12] : memref<2x1x32xf32, #tpu.memory_space<vmem>>, vector<1x1x32xf32>
    %12 = vector.shape_cast %11 : vector<1x1x32xf32> to vector<1x32xf32>
    %13 = vector.broadcast %12 : vector<1x32xf32> to vector<16x32xf32>
    %14 = arith.addf %10, %13 : vector<16x32xf32>
    %15 = arith.negf %14 : vector<16x32xf32>
    %16 = math.exp %15 : vector<16x32xf32>
    %cst_13 = arith.constant 1.000000e+00 : f32
    %17 = vector.broadcast %cst_13 : f32 to vector<16x32xf32>
    %18 = arith.addf %17, %16 : vector<16x32xf32>
    %19 = arith.divf %17, %18 : vector<16x32xf32>
    %20 = arith.mulf %7, %19 : vector<16x32xf32>
    %c0_14 = arith.constant 0 : index
    %c0_15 = arith.constant 0 : index
    %21 = vector.load %arg5[%c0_14, %c0_15] : memref<16x32xf32, #tpu.memory_space<vmem>>, vector<16x32xf32>
    tpu.vector_store %arg5[%c0_14, %c0_15], %20 {strides = array<i32>} : memref<16x32xf32, #tpu.memory_space<vmem>>, vector<16x32xf32>,
    return
  }
  func.func @transform_0(%arg0: i32, %arg1: i32) -> (i32, i32) {
    %c0_i32 = arith.constant 0 : i32
    %c0_i32_0 = arith.constant 0 : i32
    return %arg1, %c0_i32 : i32, i32
  }
  func.func @transform_1(%arg0: i32, %arg1: i32) -> (i32, i32, i32) {
    %c0_i32 = arith.constant 0 : i32
    %c0_i32_0 = arith.constant 0 : i32
    %c0_i32_1 = arith.constant 0 : i32
    return %c0_i32, %c0_i32_0, %arg0 : i32, i32, i32
  }
  func.func @transform_2(%arg0: i32, %arg1: i32) -> (i32, i32, i32) {
    %c0_i32 = arith.constant 0 : i32
    %c0_i32_0 = arith.constant 0 : i32
    %c0_i32_1 = arith.constant 0 : i32
    return %c0_i32, %c0_i32_0, %arg0 : i32, i32, i32
  }
  func.func @transform_3(%arg0: i32, %arg1: i32) -> (i32, i32) {
    %c0_i32 = arith.constant 0 : i32
    return %arg1, %arg0 : i32, i32
  }
}

</mosaic_0001>

<llo_original>
// kernel: tpu_custom_call.1
$region0: #{tpu_custom_call.1}
  #allocation0 [shape = 'u32[]', space=smem, size = 0x4, offset = 0x4, fixed_abs, tag = 'smem constant byte address 0x4 - core index']
  #allocation1 [shape = 'u32[144,128]{1,0:T(1,128)}', space=vmem, size = 0x12000, scoped, tag = 'internal scratch']
  %s0 = inlined_call_operand.hbm [shape: f32[16,32], index: 0, kind: input, shape index: {}]
  %s1 = inlined_call_operand.hbm [shape: f32[2,32,32], index: 1, kind: input, shape index: {}]
  %s2 = inlined_call_operand.vmem [shape: f32[2,1,32], index: 2, kind: input, shape index: {}]
  %s3 = inlined_call_operand.hbm [shape: f32[16,32], index: 3, kind: output, shape index: {}]
  %s4 = sld [smem:[#allocation0]]
  $region30: #{tpu_custom_call.1} parent=0
    _
  %s6 = ssub.s32 1, %s4
  %s7 = scalar_select 0, %s6, %s4
  $region1: #{tpu_custom_call.1} parent=0
    #allocation2 [shape = 'u8[8192]{0}', space=vmem, size = 0x2000, scoped, tag = 'input window, operand 0, single buffered']
    #allocation3 [shape = 's32[1]{0}', space=sflag, size = 0x4, scoped, tag = 'scoped memory for tpu_custom_call.1']
    #allocation4 [shape = 's32[1]{0}', space=sflag, size = 0x4, scoped, tag = 'scoped memory for tpu_custom_call.1']
    #allocation5 [shape = 'u8[32768]{0}', space=vmem, size = 0x8000, scoped, tag = 'input window, operand 1, single buffered']
    #allocation6 [shape = 's32[1]{0}', space=sflag, size = 0x4, scoped, tag = 'scoped memory for tpu_custom_call.1']
    #allocation7 [shape = 'u8[8192]{0}', space=vmem, size = 0x2000, scoped, tag = 'output window, operand 0, single buffered']
    %8 = vsyncpa [#allocation3], 0
    %9 = vsyncpa [#allocation6], 0
    %10 = vsyncpa [#allocation4], 0
    // Predicated region
    $region2: #{tpu_custom_call.1} parent=1 // pred_check
      _
    $region3: #{tpu_custom_call.1} parent=1 // pred_check_branch
      %12 = sbr.rel (0) target = $region5
    $region4: #{tpu_custom_call.1} parent=1 // pred_region
      %s14 = ssub.s32 256, 256
      %15 = vsyncadd [#allocation3], %s14
      %s16 = sshll.u32 [#allocation2], 4
      %s17 = int_to_ptr.vmem [resolvable:$true] %s16
      %22 = dma.hbm_to_vmem [thread:$0]  %s0, 256, %s17, [#allocation3], 128, 128, 8
    $region5: #{tpu_custom_call.1} parent=1 // pred_fallthru
      _
    // Predicated region
    $region6: #{tpu_custom_call.1} parent=1 // pred_check
      _
    $region7: #{tpu_custom_call.1} parent=1 // pred_check_branch
      %24 = sbr.rel (0) target = $region9
    $region8: #{tpu_custom_call.1} parent=1 // pred_region
      %s26 = ssub.s32 1024, 1024
      %27 = vsyncadd [#allocation6], %s26
      %s28 = sshll.u32 [#allocation5], 4
      %s29 = int_to_ptr.vmem [resolvable:$true] %s28
      %34 = dma.hbm_to_vmem [thread:$0]  %s1, 1024, %s29, [#allocation6], 128, 128, 8
    $region9: #{tpu_custom_call.1} parent=1 // pred_fallthru
      _
    // Predicated region
    $region10: #{tpu_custom_call.1} parent=1 // pred_check
      _
    $region11: #{tpu_custom_call.1} parent=1 // pred_check_branch
      %36 = sbr.rel (0) target = $region13
    $region12: #{tpu_custom_call.1} parent=1 // pred_region
      _
    $region13: #{tpu_custom_call.1} parent=1 // pred_fallthru
      _
    // Predicated region
    $region14: #{tpu_custom_call.1} parent=1 // pred_check
      _
    $region15: #{tpu_custom_call.1} parent=1 // pred_check_branch
      %38 = sbr.rel (0) target = $region17
    $region16: #{tpu_custom_call.1} parent=1 // pred_region
      %39 = dma.done [#allocation3], 256
    $region17: #{tpu_custom_call.1} parent=1 // pred_fallthru
      _
    // Predicated region
    $region18: #{tpu_custom_call.1} parent=1 // pred_check
      _
    $region19: #{tpu_custom_call.1} parent=1 // pred_check_branch
      %41 = sbr.rel (0) target = $region21
    $region20: #{tpu_custom_call.1} parent=1 // pred_region
      %42 = dma.done [#allocation6], 1024
    $region21: #{tpu_custom_call.1} parent=1 // pred_fallthru
      _
    %v43 = vld [vmem:[#allocation2] sm:$0xff]
    %v44 = vld [vmem:[#allocation2 + $0x8] sm:$0xff]
    %v45 = vld [vmem:[#allocation5] sm:$0xff]
    %v46 = vld [vmem:[#allocation5 + $0x8] sm:$0xff]
    %v47 = vld [vmem:[#allocation5 + $0x10] sm:$0xff]
    %v48 = vld [vmem:[#allocation5 + $0x18] sm:$0xff]
    %v49 = vld [vmem:[%s2] sm:$0x1]
    %v51 = vlaneseq
    %v52 = vshrl.u32 %v51, 7
    %v53 = vsub.s32 0, %v52
    %v54 = vrot.slane %v49, %v53
    %vm56 = vcmask 261120
    %v58 = vsel %vm56, %v43, 0
    %v61 = vsel %vm56, %v44, 0
    %63 = vmatprep.subr.mxu0 0.0
    %64 = vmatpush1.msra.mxu0 0.0
    %65 = vmatprep.subr.mxu0 0.0
    %66 = vmatpush1.msra.mxu0 0.0
    %67 = vmatprep.subr.mxu0 0.0
    %68 = vmatpush1.msra.mxu0 0.0
    %69 = vmatprep.subr.mxu0 0.0
    %70 = vmatpush1.msra.mxu0 0.0
    %71 = vmatprep.subr.mxu0 0.0
    %72 = vmatpush1.msra.mxu0 0.0
    %73 = vmatprep.subr.mxu0 0.0
    %74 = vmatpush1.msra.mxu0 0.0
    %75 = vmatprep.subr.mxu0 0.0
    %76 = vmatpush1.msra.mxu0 0.0
    %77 = vmatprep.subr.mxu0 0.0
    %78 = vmatpush1.msra.mxu0 0.0
    %79 = vmatprep.subr.mxu0 0.0
    %80 = vmatpush1.msra.mxu0 0.0
    %81 = vmatprep.subr.mxu0 0.0
    %82 = vmatpush1.msra.mxu0 0.0
    %83 = vmatprep.subr.mxu0 0.0
    %84 = vmatpush1.msra.mxu0 0.0
    %85 = vmatprep.subr.mxu0 0.0
    %86 = vmatpush1.msra.mxu0 0.0
    %87 = vmatprep.subr.mxu0 0.0
    %88 = vmatpush1.msra.mxu0 %v48
    %89 = vmatprep.subr.mxu0 0.0
    %90 = vmatpush1.msra.mxu0 %v47
    %91 = vmatprep.subr.mxu0 0.0
    %92 = vmatpush1.msra.mxu0 %v46
    %93 = vmatprep.subr.mxu0 0.0
    %94 = vmatpush1.msra.mxu0 %v45
    %95 = vmatprep.subr.mxu0 0.0
    %96 = vmatpush2.msra.mxu0 0.0
    %97 = vmatprep.subr.mxu0 0.0
    %98 = vmatpush2.msra.mxu0 0.0
    %99 = vmatprep.subr.mxu0 0.0
    %100 = vmatpush2.msra.mxu0 0.0
    %101 = vmatprep.subr.mxu0 0.0
    %102 = vmatpush2.msra.mxu0 0.0
    %103 = vmatprep.subr.mxu0 0.0
    %104 = vmatpush2.msra.mxu0 0.0
    %105 = vmatprep.subr.mxu0 0.0
    %106 = vmatpush2.msra.mxu0 0.0
    %107 = vmatprep.subr.mxu0 0.0
    %108 = vmatpush2.msra.mxu0 0.0
    %109 = vmatprep.subr.mxu0 0.0
    %110 = vmatpush2.msra.mxu0 0.0
    %111 = vmatprep.subr.mxu0 0.0
    %112 = vmatpush2.msra.mxu0 0.0
    %113 = vmatprep.subr.mxu0 0.0
    %114 = vmatpush2.msra.mxu0 0.0
    %115 = vmatprep.subr.mxu0 0.0
    %116 = vmatpush2.msra.mxu0 0.0
    %117 = vmatprep.subr.mxu0 0.0
    %118 = vmatpush2.msra.mxu0 0.0
    %119 = vmatprep.subr.mxu0 0.0
    %120 = vmatpush2.msra.mxu0 0.0
    %121 = vmatprep.subr.mxu0 0.0
    %122 = vmatpush2.msra.mxu0 0.0
    %123 = vmatprep.subr.mxu0 0.0
    %124 = vmatpush2.msra.mxu0 0.0
    %125 = vmatprep.subr.mxu0 0.0
    %126 = vmatpush2.msra.mxu0 0.0
    %127 = vmatprep.mubr.f32.mxu0 0.0
    %128 = vmatmul.mubr.f32.gmra.mxu0 %v58
    %v129 = vpop.f32.mrf.mxu0
    %v130 = vadd.f32 %v54, %v129
    %v131 = vpop.f32.mrf.mxu0
    %132 = vmatprep.mubr.f32.mxu0 0.0
    %133 = vmatmul.mubr.f32.gmra.mxu0 %v61
    %v134 = vpop.f32.mrf.mxu0
    %v135 = vadd.f32 %v54, %v134
    %v136 = vpop.f32.mrf.mxu0
    %137 = vdwg.mxu0
    %s138 = scalar_lea.vmem [#allocation5], 32
    %v139 = vld [vmem:[%s138] sm:$0xff]
    %v140 = vld [vmem:[%s138 + $0x8] sm:$0xff]
    %v141 = vld [vmem:[%s138 + $0x10] sm:$0xff]
    %v142 = vld [vmem:[%s138 + $0x18] sm:$0xff]
    %s143 = scalar_lea.vmem %s2, 1
    %v144 = vld [vmem:[%s143] sm:$0x1]
    %v146 = vlaneseq
    %v147 = vshrl.u32 %v146, 7
    %v148 = vsub.s32 0, %v147
    %v149 = vrot.slane %v144, %v148
    %151 = vmatprep.subr.mxu0 0.0
    %152 = vmatpush1.msra.mxu0 0.0
    %153 = vmatprep.subr.mxu0 0.0
    %154 = vmatpush1.msra.mxu0 0.0
    %155 = vmatprep.subr.mxu0 0.0
    %156 = vmatpush1.msra.mxu0 0.0
    %157 = vmatprep.subr.mxu0 0.0
    %158 = vmatpush1.msra.mxu0 0.0
    %159 = vmatprep.subr.mxu0 0.0
    %160 = vmatpush1.msra.mxu0 0.0
    %161 = vmatprep.subr.mxu0 0.0
    %162 = vmatpush1.msra.mxu0 0.0
    %163 = vmatprep.subr.mxu0 0.0
    %164 = vmatpush1.msra.mxu0 0.0
    %165 = vmatprep.subr.mxu0 0.0
    %166 = vmatpush1.msra.mxu0 0.0
    %167 = vmatprep.subr.mxu0 0.0
    %168 = vmatpush1.msra.mxu0 0.0
    %169 = vmatprep.subr.mxu0 0.0
    %170 = vmatpush1.msra.mxu0 0.0
    %171 = vmatprep.subr.mxu0 0.0
    %172 = vmatpush1.msra.mxu0 0.0
    %173 = vmatprep.subr.mxu0 0.0
    %174 = vmatpush1.msra.mxu0 0.0
    %175 = vmatprep.subr.mxu0 0.0
    %176 = vmatpush1.msra.mxu0 %v142
    %177 = vmatprep.subr.mxu0 0.0
    %178 = vmatpush1.msra.mxu0 %v141
    %179 = vmatprep.subr.mxu0 0.0
    %180 = vmatpush1.msra.mxu0 %v140
    %181 = vmatprep.subr.mxu0 0.0
    %182 = vmatpush1.msra.mxu0 %v139
    %183 = vmatprep.subr.mxu0 0.0
    %184 = vmatpush2.msra.mxu0 0.0
    %185 = vmatprep.subr.mxu0 0.0
    %186 = vmatpush2.msra.mxu0 0.0
    %187 = vmatprep.subr.mxu0 0.0
    %188 = vmatpush2.msra.mxu0 0.0
    %189 = vmatprep.subr.mxu0 0.0
    %190 = vmatpush2.msra.mxu0 0.0
    %191 = vmatprep.subr.mxu0 0.0
    %192 = vmatpush2.msra.mxu0 0.0
    %193 = vmatprep.subr.mxu0 0.0
    %194 = vmatpush2.msra.mxu0 0.0
    %195 = vmatprep.subr.mxu0 0.0
    %196 = vmatpush2.msra.mxu0 0.0
    %197 = vmatprep.subr.mxu0 0.0
    %198 = vmatpush2.msra.mxu0 0.0
    %199 = vmatprep.subr.mxu0 0.0
    %200 = vmatpush2.msra.mxu0 0.0
    %201 = vmatprep.subr.mxu0 0.0
    %202 = vmatpush2.msra.mxu0 0.0
    %203 = vmatprep.subr.mxu0 0.0
    %204 = vmatpush2.msra.mxu0 0.0
    %205 = vmatprep.subr.mxu0 0.0
    %206 = vmatpush2.msra.mxu0 0.0
    %207 = vmatprep.subr.mxu0 0.0
    %208 = vmatpush2.msra.mxu0 0.0
    %209 = vmatprep.subr.mxu0 0.0
    %210 = vmatpush2.msra.mxu0 0.0
    %211 = vmatprep.subr.mxu0 0.0
    %212 = vmatpush2.msra.mxu0 0.0
    %213 = vmatprep.subr.mxu0 0.0
    %214 = vmatpush2.msra.mxu0 0.0
    %215 = vmatprep.mubr.f32.mxu0 0.0
    %216 = vmatmul.mubr.f32.gmra.mxu0 %v58
    %v217 = vpop.f32.mrf.mxu0
    %v218 = vadd.f32 %v149, %v217
    %v219 = vpop.f32.mrf.mxu0
    %220 = vmatprep.mubr.f32.mxu0 0.0
    %221 = vmatmul.mubr.f32.gmra.mxu0 %v61
    %v222 = vpop.f32.mrf.mxu0
    %v223 = vadd.f32 %v149, %v222
    %v224 = vpop.f32.mrf.mxu0
    %225 = vdwg.mxu0
    %v226 = vxor.u32 %v218, 2147483648
    %v227 = vxor.u32 %v223, 2147483648
    %v228 = vmul.f32 %v226, 1.442695
    %v229 = vpow.pop %v228
    %v230 = vmul.f32 %v227, 1.442695
    %v231 = vpow.pop %v230
    %v232 = vadd.f32 %v229, 1.0
    %v233 = vadd.f32 %v231, 1.0
    %v234 = vrcp.pop %v232
    %v235 = vmul.f32 1.0, %v234
    %v236 = vrcp.pop %v233
    %v237 = vmul.f32 1.0, %v236
    %v238 = vmul.f32 %v130, %v235
    %v239 = vmul.f32 %v135, %v237
    %240 = vst.msk [vmem:[#allocation7] sm:$0xff] %vm56, %v238
    %241 = vst.msk [vmem:[#allocation7 + $0x8] sm:$0xff] %vm56, %v239
    // Predicated region
    $region22: #{tpu_custom_call.1} parent=1 // pred_check
      _
    $region23: #{tpu_custom_call.1} parent=1 // pred_check_branch
      %243 = sbr.rel (0) target = $region25
    $region24: #{tpu_custom_call.1} parent=1 // pred_region
      %s245 = ssub.s32 256, 256
      %246 = vsyncadd [#allocation4], %s245
      %s247 = sshll.u32 [#allocation7], 4
      %s248 = int_to_ptr.vmem [resolvable:$true] %s247
      %253 = dma.vmem_to_hbm [thread:$0]  %s248, 256, %s3, [#allocation4], 128, 128, 8
    $region25: #{tpu_custom_call.1} parent=1 // pred_fallthru
      _
    // Predicated region
    $region26: #{tpu_custom_call.1} parent=1 // pred_check
      _
    $region27: #{tpu_custom_call.1} parent=1 // pred_check_branch
      %255 = sbr.rel (0) target = $region29
    $region28: #{tpu_custom_call.1} parent=1 // pred_region
      %256 = dma.done [#allocation4], 256
    $region29: #{tpu_custom_call.1} parent=1 // pred_fallthru
      _
    %257 = vsyncpa [#allocation3], 1
    %258 = vsyncpa [#allocation6], 1
    %259 = vsyncpa [#allocation4], 1

// kernel: tpu_custom_call.1
$region0: #{tpu_custom_call.1}
  #allocation0 [shape = 'u32[]', space=smem, size = 0x4, offset = 0x4, fixed_abs, tag = 'smem constant byte address 0x4 - core index']
  #allocation1 [shape = 'u32[144,128]{1,0:T(1,128)}', space=vmem, size = 0x12000, scoped, tag = 'internal scratch']
  %s0 = inlined_call_operand.hbm [shape: f32[16,32], index: 0, kind: input, shape index: {}]
  %s1 = inlined_call_operand.hbm [shape: f32[2,32,32], index: 1, kind: input, shape index: {}]
  %s2 = inlined_call_operand.vmem [shape: f32[2,1,32], index: 2, kind: input, shape index: {}]
  %s3 = inlined_call_operand.hbm [shape: f32[16,32], index: 3, kind: output, shape index: {}]
  %s4 = sld [smem:[#allocation0]]
  $region30: #{tpu_custom_call.1} parent=0
    _
  %s6 = ssub.s32 1, %s4
  %s7 = scalar_select 0, %s6, %s4
  $region1: #{tpu_custom_call.1} parent=0
    #allocation2 [shape = 'u8[8192]{0}', space=vmem, size = 0x2000, scoped, tag = 'input window, operand 0, single buffered']
    #allocation3 [shape = 's32[1]{0}', space=sflag, size = 0x4, scoped, tag = 'scoped memory for tpu_custom_call.1']
    #allocation4 [shape = 's32[1]{0}', space=sflag, size = 0x4, scoped, tag = 'scoped memory for tpu_custom_call.1']
    #allocation5 [shape = 'u8[32768]{0}', space=vmem, size = 0x8000, scoped, tag = 'input window, operand 1, single buffered']
    #allocation6 [shape = 's32[1]{0}', space=sflag, size = 0x4, scoped, tag = 'scoped memory for tpu_custom_call.1']
    #allocation7 [shape = 'u8[8192]{0}', space=vmem, size = 0x2000, scoped, tag = 'output window, operand 0, single buffered']
    %8 = vsyncpa [#allocation3], 0
    %9 = vsyncpa [#allocation6], 0
    %10 = vsyncpa [#allocation4], 0
    // Predicated region
    $region2: #{tpu_custom_call.1} parent=1 // pred_check
      _
    $region3: #{tpu_custom_call.1} parent=1 // pred_check_branch
      %12 = sbr.rel (0) target = $region5
    $region4: #{tpu_custom_call.1} parent=1 // pred_region
      %s14 = ssub.s32 256, 256
      %15 = vsyncadd [#allocation3], %s14
      %s16 = sshll.u32 [#allocation2], 4
      %s17 = int_to_ptr.vmem [resolvable:$true] %s16
      %22 = dma.hbm_to_vmem [thread:$0]  %s0, 256, %s17, [#allocation3], 128, 128, 8
    $region5: #{tpu_custom_call.1} parent=1 // pred_fallthru
      _
    // Predicated region
    $region6: #{tpu_custom_call.1} parent=1 // pred_check
      _
    $region7: #{tpu_custom_call.1} parent=1 // pred_check_branch
      %24 = sbr.rel (0) target = $region9
    $region8: #{tpu_custom_call.1} parent=1 // pred_region
      %s26 = ssub.s32 1024, 1024
      %27 = vsyncadd [#allocation6], %s26
      %s28 = sshll.u32 [#allocation5], 4
      %s29 = int_to_ptr.vmem [resolvable:$true] %s28
      %34 = dma.hbm_to_vmem [thread:$0]  %s1, 1024, %s29, [#allocation6], 128, 128, 8
    $region9: #{tpu_custom_call.1} parent=1 // pred_fallthru
      _
    // Predicated region
    $region10: #{tpu_custom_call.1} parent=1 // pred_check
      _
    $region11: #{tpu_custom_call.1} parent=1 // pred_check_branch
      %36 = sbr.rel (0) target = $region13
    $region12: #{tpu_custom_call.1} parent=1 // pred_region
      _
    $region13: #{tpu_custom_call.1} parent=1 // pred_fallthru
      _
    // Predicated region
    $region14: #{tpu_custom_call.1} parent=1 // pred_check
      _
    $region15: #{tpu_custom_call.1} parent=1 // pred_check_branch
      %38 = sbr.rel (0) target = $region17
    $region16: #{tpu_custom_call.1} parent=1 // pred_region
      %39 = dma.done [#allocation3], 256
    $region17: #{tpu_custom_call.1} parent=1 // pred_fallthru
      _
    // Predicated region
    $region18: #{tpu_custom_call.1} parent=1 // pred_check
      _
    $region19: #{tpu_custom_call.1} parent=1 // pred_check_branch
      %41 = sbr.rel (0) target = $region21
    $region20: #{tpu_custom_call.1} parent=1 // pred_region
      %42 = dma.done [#allocation6], 1024
    $region21: #{tpu_custom_call.1} parent=1 // pred_fallthru
      _
    %v43 = vld [vmem:[#allocation2] sm:$0xff]
    %v44 = vld [vmem:[#allocation2 + $0x8] sm:$0xff]
    %v45 = vld [vmem:[#allocation5] sm:$0xff]
    %v46 = vld [vmem:[#allocation5 + $0x8] sm:$0xff]
    %v47 = vld [vmem:[#allocation5 + $0x10] sm:$0xff]
    %v48 = vld [vmem:[#allocation5 + $0x18] sm:$0xff]
    %v49 = vld [vmem:[%s2] sm:$0x1]
    %v51 = vlaneseq
    %v52 = vshrl.u32 %v51, 7
    %v53 = vsub.s32 0, %v52
    %v54 = vrot.slane %v49, %v53
    %vm56 = vcmask 261120
    %v58 = vsel %vm56, %v43, 0
    %v61 = vsel %vm56, %v44, 0
    %63 = vmatprep.subr.mxu0 0.0
    %64 = vmatpush1.msra.mxu0 0.0
    %65 = vmatprep.subr.mxu0 0.0
    %66 = vmatpush1.msra.mxu0 0.0
    %67 = vmatprep.subr.mxu0 0.0
    %68 = vmatpush1.msra.mxu0 0.0
    %69 = vmatprep.subr.mxu0 0.0
    %70 = vmatpush1.msra.mxu0 0.0
    %71 = vmatprep.subr.mxu0 0.0
    %72 = vmatpush1.msra.mxu0 0.0
    %73 = vmatprep.subr.mxu0 0.0
    %74 = vmatpush1.msra.mxu0 0.0
    %75 = vmatprep.subr.mxu0 0.0
    %76 = vmatpush1.msra.mxu0 0.0
    %77 = vmatprep.subr.mxu0 0.0
    %78 = vmatpush1.msra.mxu0 0.0
    %79 = vmatprep.subr.mxu0 0.0
    %80 = vmatpush1.msra.mxu0 0.0
    %81 = vmatprep.subr.mxu0 0.0
    %82 = vmatpush1.msra.mxu0 0.0
    %83 = vmatprep.subr.mxu0 0.0
    %84 = vmatpush1.msra.mxu0 0.0
    %85 = vmatprep.subr.mxu0 0.0
    %86 = vmatpush1.msra.mxu0 0.0
    %87 = vmatprep.subr.mxu0 0.0
    %88 = vmatpush1.msra.mxu0 %v48
    %89 = vmatprep.subr.mxu0 0.0
    %90 = vmatpush1.msra.mxu0 %v47
    %91 = vmatprep.subr.mxu0 0.0
    %92 = vmatpush1.msra.mxu0 %v46
    %93 = vmatprep.subr.mxu0 0.0
    %94 = vmatpush1.msra.mxu0 %v45
    %95 = vmatprep.subr.mxu0 0.0
    %96 = vmatpush2.msra.mxu0 0.0
    %97 = vmatprep.subr.mxu0 0.0
    %98 = vmatpush2.msra.mxu0 0.0
    %99 = vmatprep.subr.mxu0 0.0
    %100 = vmatpush2.msra.mxu0 0.0
    %101 = vmatprep.subr.mxu0 0.0
    %102 = vmatpush2.msra.mxu0 0.0
    %103 = vmatprep.subr.mxu0 0.0
    %104 = vmatpush2.msra.mxu0 0.0
    %105 = vmatprep.subr.mxu0 0.0
    %106 = vmatpush2.msra.mxu0 0.0
    %107 = vmatprep.subr.mxu0 0.0
    %108 = vmatpush2.msra.mxu0 0.0
    %109 = vmatprep.subr.mxu0 0.0
    %110 = vmatpush2.msra.mxu0 0.0
    %111 = vmatprep.subr.mxu0 0.0
    %112 = vmatpush2.msra.mxu0 0.0
    %113 = vmatprep.subr.mxu0 0.0
    %114 = vmatpush2.msra.mxu0 0.0
    %115 = vmatprep.subr.mxu0 0.0
    %116 = vmatpush2.msra.mxu0 0.0
    %117 = vmatprep.subr.mxu0 0.0
    %118 = vmatpush2.msra.mxu0 0.0
    %119 = vmatprep.subr.mxu0 0.0
    %120 = vmatpush2.msra.mxu0 0.0
    %121 = vmatprep.subr.mxu0 0.0
    %122 = vmatpush2.msra.mxu0 0.0
    %123 = vmatprep.subr.mxu0 0.0
    %124 = vmatpush2.msra.mxu0 0.0
    %125 = vmatprep.subr.mxu0 0.0
    %126 = vmatpush2.msra.mxu0 0.0
    %127 = vmatprep.mubr.f32.mxu0 0.0
    %128 = vmatmul.mubr.f32.gmra.mxu0 %v58
    %v129 = vpop.f32.mrf.mxu0
    %v130 = vadd.f32 %v54, %v129
    %v131 = vpop.f32.mrf.mxu0
    %132 = vmatprep.mubr.f32.mxu0 0.0
    %133 = vmatmul.mubr.f32.gmra.mxu0 %v61
    %v134 = vpop.f32.mrf.mxu0
    %v135 = vadd.f32 %v54, %v134
    %v136 = vpop.f32.mrf.mxu0
    %137 = vdwg.mxu0
    %s138 = scalar_lea.vmem [#allocation5], 32
    %v139 = vld [vmem:[%s138] sm:$0xff]
    %v140 = vld [vmem:[%s138 + $0x8] sm:$0xff]
    %v141 = vld [vmem:[%s138 + $0x10] sm:$0xff]
    %v142 = vld [vmem:[%s138 + $0x18] sm:$0xff]
    %s143 = scalar_lea.vmem %s2, 1
    %v144 = vld [vmem:[%s143] sm:$0x1]
    %v146 = vlaneseq
    %v147 = vshrl.u32 %v146, 7
    %v148 = vsub.s32 0, %v147
    %v149 = vrot.slane %v144, %v148
    %151 = vmatprep.subr.mxu0 0.0
    %152 = vmatpush1.msra.mxu0 0.0
    %153 = vmatprep.subr.mxu0 0.0
    %154 = vmatpush1.msra.mxu0 0.0
    %155 = vmatprep.subr.mxu0 0.0
    %156 = vmatpush1.msra.mxu0 0.0
    %157 = vmatprep.subr.mxu0 0.0
    %158 = vmatpush1.msra.mxu0 0.0
    %159 = vmatprep.subr.mxu0 0.0
    %160 = vmatpush1.msra.mxu0 0.0
    %161 = vmatprep.subr.mxu0 0.0
    %162 = vmatpush1.msra.mxu0 0.0
    %163 = vmatprep.subr.mxu0 0.0
    %164 = vmatpush1.msra.mxu0 0.0
    %165 = vmatprep.subr.mxu0 0.0
    %166 = vmatpush1.msra.mxu0 0.0
    %167 = vmatprep.subr.mxu0 0.0
    %168 = vmatpush1.msra.mxu0 0.0
    %169 = vmatprep.subr.mxu0 0.0
    %170 = vmatpush1.msra.mxu0 0.0
    %171 = vmatprep.subr.mxu0 0.0
    %172 = vmatpush1.msra.mxu0 0.0
    %173 = vmatprep.subr.mxu0 0.0
    %174 = vmatpush1.msra.mxu0 0.0
    %175 = vmatprep.subr.mxu0 0.0
    %176 = vmatpush1.msra.mxu0 %v142
    %177 = vmatprep.subr.mxu0 0.0
    %178 = vmatpush1.msra.mxu0 %v141
    %179 = vmatprep.subr.mxu0 0.0
    %180 = vmatpush1.msra.mxu0 %v140
    %181 = vmatprep.subr.mxu0 0.0
    %182 = vmatpush1.msra.mxu0 %v139
    %183 = vmatprep.subr.mxu0 0.0
    %184 = vmatpush2.msra.mxu0 0.0
    %185 = vmatprep.subr.mxu0 0.0
    %186 = vmatpush2.msra.mxu0 0.0
    %187 = vmatprep.subr.mxu0 0.0
    %188 = vmatpush2.msra.mxu0 0.0
    %189 = vmatprep.subr.mxu0 0.0
    %190 = vmatpush2.msra.mxu0 0.0
    %191 = vmatprep.subr.mxu0 0.0
    %192 = vmatpush2.msra.mxu0 0.0
    %193 = vmatprep.subr.mxu0 0.0
    %194 = vmatpush2.msra.mxu0 0.0
    %195 = vmatprep.subr.mxu0 0.0
    %196 = vmatpush2.msra.mxu0 0.0
    %197 = vmatprep.subr.mxu0 0.0
    %198 = vmatpush2.msra.mxu0 0.0
    %199 = vmatprep.subr.mxu0 0.0
    %200 = vmatpush2.msra.mxu0 0.0
    %201 = vmatprep.subr.mxu0 0.0
    %202 = vmatpush2.msra.mxu0 0.0
    %203 = vmatprep.subr.mxu0 0.0
    %204 = vmatpush2.msra.mxu0 0.0
    %205 = vmatprep.subr.mxu0 0.0
    %206 = vmatpush2.msra.mxu0 0.0
    %207 = vmatprep.subr.mxu0 0.0
    %208 = vmatpush2.msra.mxu0 0.0
    %209 = vmatprep.subr.mxu0 0.0
    %210 = vmatpush2.msra.mxu0 0.0
    %211 = vmatprep.subr.mxu0 0.0
    %212 = vmatpush2.msra.mxu0 0.0
    %213 = vmatprep.subr.mxu0 0.0
    %214 = vmatpush2.msra.mxu0 0.0
    %215 = vmatprep.mubr.f32.mxu0 0.0
    %216 = vmatmul.mubr.f32.gmra.mxu0 %v58
    %v217 = vpop.f32.mrf.mxu0
    %v218 = vadd.f32 %v149, %v217
    %v219 = vpop.f32.mrf.mxu0
    %220 = vmatprep.mubr.f32.mxu0 0.0
    %221 = vmatmul.mubr.f32.gmra.mxu0 %v61
    %v222 = vpop.f32.mrf.mxu0
    %v223 = vadd.f32 %v149, %v222
    %v224 = vpop.f32.mrf.mxu0
    %225 = vdwg.mxu0
    %v226 = vxor.u32 %v218, 2147483648
    %v227 = vxor.u32 %v223, 2147483648
    %v228 = vmul.f32 %v226, 1.442695
    %v229 = vpow.pop %v228
    %v230 = vmul.f32 %v227, 1.442695
    %v231 = vpow.pop %v230
    %v232 = vadd.f32 %v229, 1.0
    %v233 = vadd.f32 %v231, 1.0
    %v234 = vrcp.pop %v232
    %v235 = vmul.f32 1.0, %v234
    %v236 = vrcp.pop %v233
    %v237 = vmul.f32 1.0, %v236
    %v238 = vmul.f32 %v130, %v235
    %v239 = vmul.f32 %v135, %v237
    %240 = vst.msk [vmem:[#allocation7] sm:$0xff] %vm56, %v238
    %241 = vst.msk [vmem:[#allocation7 + $0x8] sm:$0xff] %vm56, %v239
    // Predicated region
    $region22: #{tpu_custom_call.1} parent=1 // pred_check
      _
    $region23: #{tpu_custom_call.1} parent=1 // pred_check_branch
      %243 = sbr.rel (0) target = $region25
    $region24: #{tpu_custom_call.1} parent=1 // pred_region
      %s245 = ssub.s32 256, 256
      %246 = vsyncadd [#allocation4], %s245
      %s247 = sshll.u32 [#allocation7], 4
      %s248 = int_to_ptr.vmem [resolvable:$true] %s247
      %253 = dma.vmem_to_hbm [thread:$0]  %s248, 256, %s3, [#allocation4], 128, 128, 8
    $region25: #{tpu_custom_call.1} parent=1 // pred_fallthru
      _
    // Predicated region
    $region26: #{tpu_custom_call.1} parent=1 // pred_check
      _
    $region27: #{tpu_custom_call.1} parent=1 // pred_check_branch
      %255 = sbr.rel (0) target = $region29
    $region28: #{tpu_custom_call.1} parent=1 // pred_region
      %256 = dma.done [#allocation4], 256
    $region29: #{tpu_custom_call.1} parent=1 // pred_fallthru
      _
    %257 = vsyncpa [#allocation3], 1
    %258 = vsyncpa [#allocation6], 1
    %259 = vsyncpa [#allocation4], 1

</llo_original>
